<compile_context>
chip_gen: v7x
topology: tpu7x:2x2x1
jax: 0.10.0
libtpu: 0.0.40
codegen_flags: <defaults>
</compile_context>

<pallas_src>
import functools

import jax
import jax.numpy as jnp
from jax.experimental import pallas as pl
from jax.experimental.pallas import tpu as pltpu

LANE = 128
SUB = 8
_MIN_SPLIT_ROWS = 256  # only force >=2 grid steps (v7x megacore) above this


def _round_up(n, m):
    return ((n + m - 1) // m) * m


# ----------------------------------------------------------------------------
# Kernel
# ----------------------------------------------------------------------------
def _shared_bottom_mtl_kernel(x_ref, w1_ref, w_ref, b_ref, out_ref, *, sig_cols):
    """x_ref: [TB, input_dim] f32 ; w1_ref: [input_dim, 128] bf16 ;
    w_ref: [4*128, 128] bf16 (layers 2..5, heads fused) ; b_ref: [8, 128] f32 ;
    out_ref: [TB, 128] bf16 merged (task1 | task2 | zero-pad) output."""
    b = b_ref[...]  # f32 [8, 128]

    def dot(a, w):  # bf16 MXU operands, f32 accumulation
        return jnp.dot(a.astype(jnp.bfloat16), w,
                       preferred_element_type=jnp.float32)

    def act(y, i, relu=True):  # f32 bias-add (+ ReLU)
        y = y + b[i:i + 1, :]
        return jnp.maximum(y, 0.0) if relu else y

    # shared bottom (3 layers) + fused task heads (2 layers) = 5 MXU matmuls
    h = act(dot(x_ref[...], w1_ref[...]), 0)                       # layer 1
    h = act(dot(h, w_ref[0 * LANE:1 * LANE, :]), 1)                # layer 2
    h = act(dot(h, w_ref[1 * LANE:2 * LANE, :]), 2)                # layer 3
    h = act(dot(h, w_ref[2 * LANE:3 * LANE, :]), 3)                # heads L1
    y = act(dot(h, w_ref[3 * LANE:4 * LANE, :]), 4, relu=False)    # heads L2

    # sigmoid on merged columns {0, 2, out1+1}; padded columns stay 0.
    col = jax.lax.broadcasted_iota(jnp.int32, y.shape, 1)
    mask = functools.reduce(lambda m, c: m | (col == c), sig_cols[1:],
                            col == sig_cols[0])
    out_ref[...] = jnp.where(mask, jax.nn.sigmoid(y), y).astype(out_ref.dtype)


# ----------------------------------------------------------------------------
# Parameter packing (plain JAX, done once)
# ----------------------------------------------------------------------------
def pack_params(p):
    """Pack [in,out]-layout weights / 1-D biases into kernel-ready slabs."""
    input_dim, h1 = p["w1"].shape
    h2 = p["w2"].shape[1]
    h3 = p["w3"].shape[1]
    out1 = p["t1w2"].shape[1]
    out2 = p["t2w2"].shape[1]
    assert max(h1, h3, 2 * h2, out1 + out2) <= LANE
    assert out1 >= 3 and out2 >= 2  # PyTorch module hard-codes sigmoid cols 0,2 / 1

    def pad_block(w, k_pad):
        k, n = w.shape
        return jnp.pad(w.astype(jnp.float32), ((0, k_pad - k), (0, LANE - n)))

    # layer 1 weight kept at its true K (= input_dim); only output cols padded.
    w1_block = pad_block(p["w1"], input_dim).astype(jnp.bfloat16)   # [in, 128]

    # fused head layer 1: concat along output dim; layer 2: block-diagonal.
    wh1 = jnp.concatenate([p["t1w1"], p["t2w1"]], axis=1)           # [h3, 2*h2]
    wh2 = jnp.zeros((2 * h2, out1 + out2), jnp.float32)
    wh2 = wh2.at[:h2, :out1].set(p["t1w2"])
    wh2 = wh2.at[h2:, out1:].set(p["t2w2"])

    w_slab = jnp.concatenate([
        pad_block(p["w2"], LANE),
        pad_block(p["w3"], LANE),
        pad_block(wh1, LANE),
        pad_block(wh2, LANE),
    ], axis=0).astype(jnp.bfloat16)                                 # [512, 128]

    def pad_bias(bvec):
        bvec = bvec.reshape(1, -1).astype(jnp.float32)
        return jnp.pad(bvec, ((0, 0), (0, LANE - bvec.shape[1])))

    b_rows = [pad_bias(p["b1"]), pad_bias(p["b2"]), pad_bias(p["b3"]),
              pad_bias(jnp.concatenate([p["t1b1"], p["t2b1"]])),
              pad_bias(jnp.concatenate([p["t1b2"], p["t2b2"]]))]
    b_slab = jnp.concatenate(
        b_rows + [jnp.zeros((SUB - len(b_rows), LANE), jnp.float32)], axis=0)

    meta = dict(input_dim=input_dim, out1=out1, out2=out2,
                sig_cols=(0, 2, out1 + 1))
    return w1_block, w_slab, b_slab, meta


# ----------------------------------------------------------------------------
# Wrapper
# ----------------------------------------------------------------------------
def shared_bottom_mtl_forward(x, w1_block, w_slab, b_slab, meta, *, block_b=1024):
    """x: [B, input_dim] f32 (unpadded). Returns (task1 [B,out1], task2 [B,out2]) f32."""
    B, input_dim = x.shape
    assert input_dim == meta["input_dim"]
    out1, out2 = meta["out1"], meta["out2"]

    B8 = _round_up(B, SUB)
    TB = min(B8, block_b)                       # batch tile, multiple of 8
    if B8 >= _MIN_SPLIT_ROWS:                   # keep >=2 grid steps (v7x 2 TCs)
        TB = min(TB, _round_up((B8 + 1) // 2, SUB))
    grid = pl.cdiv(B8, TB)
    B_pad = grid * TB                           # pad rows live only in the output

    R = w_slab.shape[0]
    kernel = functools.partial(_shared_bottom_mtl_kernel,
                               sig_cols=meta["sig_cols"])

    merged = pl.pallas_call(
        kernel,
        out_shape=jax.ShapeDtypeStruct((B_pad, LANE), jnp.bfloat16),
        grid_spec=pltpu.PrefetchScalarGridSpec(
            num_scalar_prefetch=0,
            grid=(grid,),
            in_specs=[
                pl.BlockSpec((TB, input_dim), lambda i: (i, 0)),    # x tile (pipelined)
                pl.BlockSpec((input_dim, LANE), lambda i: (0, 0)),  # layer-1 W (resident)
                pl.BlockSpec((R, LANE), lambda i: (0, 0)),          # layers 2..5 slab (resident)
                pl.BlockSpec((SUB, LANE), lambda i: (0, 0)),        # bias slab (resident)
            ],
            out_specs=pl.BlockSpec((TB, LANE), lambda i: (i, 0)),
        ),
        compiler_params=pltpu.CompilerParams(
            dimension_semantics=("parallel",)),
    )(x, w1_block, w_slab, b_slab)

    t1 = merged[:B, :out1].astype(jnp.float32)
    t2 = merged[:B, out1:out1 + out2].astype(jnp.float32)
    return t1, t2


# ----------------------------------------------------------------------------
# Init + pure-JAX reference
# ----------------------------------------------------------------------------
def init_params(key, input_dim, h1, h2, h3, out1, out2):
    """PyTorch-Linear-style init; weights pre-transposed to [in,out], biases 1-D."""
    def linear(key, fan_in, fan_out):
        kw, kb = jax.random.split(key)
        bound = 1.0 / jnp.sqrt(jnp.float32(fan_in))
        w = jax.random.uniform(kw, (fan_in, fan_out), jnp.float32, -bound, bound)
        b = jax.random.uniform(kb, (fan_out,), jnp.float32, -bound, bound)
        return w, b

    keys = jax.random.split(key, 7)
    w1, b1 = linear(keys[0], input_dim, h1)
    w2, b2 = linear(keys[1], h1, h2)
    w3, b3 = linear(keys[2], h2, h3)
    t1w1, t1b1 = linear(keys[3], h3, h2)
    t1w2, t1b2 = linear(keys[4], h2, out1)
    t2w1, t2b1 = linear(keys[5], h3, h2)
    t2w2, t2b2 = linear(keys[6], h2, out2)
    return dict(w1=w1, b1=b1, w2=w2, b2=b2, w3=w3, b3=b3,
                t1w1=t1w1, t1b1=t1b1, t1w2=t1w2, t1b2=t1b2,
                t2w1=t2w1, t2b1=t2b1, t2w2=t2w2, t2b2=t2b2)


def reference_forward(x, p):
    h = jnp.maximum(x @ p["w1"] + p["b1"], 0.0)
    h = jnp.maximum(h @ p["w2"] + p["b2"], 0.0)
    shared = jnp.maximum(h @ p["w3"] + p["b3"], 0.0)

    t1 = jnp.maximum(shared @ p["t1w1"] + p["t1b1"], 0.0)
    t1 = t1 @ p["t1w2"] + p["t1b2"]
    t1 = t1.at[:, 0].set(jax.nn.sigmoid(t1[:, 0]))
    t1 = t1.at[:, 2].set(jax.nn.sigmoid(t1[:, 2]))

    t2 = jnp.maximum(shared @ p["t2w1"] + p["t2b1"], 0.0)
    t2 = t2 @ p["t2w2"] + p["t2b2"]
    t2 = t2.at[:, 1].set(jax.nn.sigmoid(t2[:, 1]))
    return t1, t2


if __name__ == "__main__":
    # shapes consistent with the module: input_dim=10, two MLP heads
    B = 8
    input_dim, h1, h2, h3 = 10, 32, 16, 8
    out1_dim, out2_dim = 3, 2   # task1 sigmoids cols 0,2 ; task2 sigmoid col 1

    key = jax.random.PRNGKey(0)
    kx, kp = jax.random.split(key)
    x = jax.random.normal(kx, (B, input_dim), jnp.float32)
    params = init_params(kp, input_dim, h1, h2, h3, out1_dim, out2_dim)

    # pack once (outside the per-call path)
    w1_block, w_slab, b_slab, meta = pack_params(params)

    fwd = jax.jit(lambda xx: shared_bottom_mtl_forward(
        xx, w1_block, w_slab, b_slab, meta))
    t1, t2 = fwd(x)
    t1 = jax.block_until_ready(t1)
    t2 = jax.block_until_ready(t2)

    r1, r2 = reference_forward(x, params)
    assert t1.shape == (B, out1_dim) and t2.shape == (B, out2_dim)
    # bf16 MXU operands + bf16 output writeback -> loosened tolerance vs f32 ref
    assert jnp.allclose(t1, r1, atol=5e-2, rtol=5e-2), "task1 mismatch"
    assert jnp.allclose(t2, r2, atol=5e-2, rtol=5e-2), "task2 mismatch"

    print("KERNEL_OK")
</pallas_src>

<mosaic_0001>
module attributes {stable_mosaic.version = 11 : i64} {
  func.func @_shared_bottom_mtl_kernel(%arg0: i32, %arg1: memref<8x10xf32, #tpu.memory_space<vmem>>, %arg2: memref<10x128xbf16, #tpu.memory_space<vmem>>, %arg3: memref<512x128xbf16, #tpu.memory_space<vmem>>, %arg4: memref<8x128xf32, #tpu.memory_space<vmem>>, %arg5: memref<8x128xbf16, #tpu.memory_space<vmem>>) attributes {dimension_semantics = [#tpu.dimension_semantics<parallel>], iteration_bounds = array<i64: 1>, scalar_prefetch = 0 : i64, scratch_operands = 0 : i64, tpu.core_type = #tpu.core_type<tc>, window_params = [{transform_indices = @transform_0, window_bounds = array<i64: 8, 10>}, {pipeline_mode = #tpu.pipeline_mode<synchronous>, transform_indices = @transform_1, window_bounds = array<i64: 10, 128>}, {pipeline_mode = #tpu.pipeline_mode<synchronous>, transform_indices = @transform_2, window_bounds = array<i64: 512, 128>}, {pipeline_mode = #tpu.pipeline_mode<synchronous>, transform_indices = @transform_3, window_bounds = array<i64: 8, 128>}, {transform_indices = @transform_4, window_bounds = array<i64: 8, 128>}]} {
    %c0 = arith.constant 0 : index
    %c0_0 = arith.constant 0 : index
    %0 = vector.load %arg4[%c0, %c0_0] : memref<8x128xf32, #tpu.memory_space<vmem>>, vector<8x128xf32>
    %c0_1 = arith.constant 0 : index
    %c0_2 = arith.constant 0 : index
    %1 = vector.load %arg1[%c0_1, %c0_2] : memref<8x10xf32, #tpu.memory_space<vmem>>, vector<8x10xf32>
    %c0_3 = arith.constant 0 : index
    %c0_4 = arith.constant 0 : index
    %2 = vector.load %arg2[%c0_3, %c0_4] : memref<10x128xbf16, #tpu.memory_space<vmem>>, vector<10x128xbf16>
    %3 = arith.truncf %1 : vector<8x10xf32> to vector<8x10xbf16>
    %cst = arith.constant dense<0.000000e+00> : vector<8x128xf32>
    %4 = tpu.matmul %3, %2, %cst {dimension_numbers = #tpu.dot_dimension_numbers<[1], [0], [0], [1], [0, 0, 1, 1], [], []>} : vector<8x10xbf16>, vector<10x128xbf16>, vector<8x128xf32> -> vector<8x128xf32>
    %5 = vector.extract_strided_slice %0 {offsets = [0, 0], sizes = [1, 128], strides = [1, 1]} : vector<8x128xf32> to vector<1x128xf32>
    %6 = vector.broadcast %5 : vector<1x128xf32> to vector<8x128xf32>
    %7 = arith.addf %4, %6 : vector<8x128xf32>
    %cst_5 = arith.constant 0.000000e+00 : f32
    %8 = vector.broadcast %cst_5 : f32 to vector<8x128xf32>
    %9 = arith.maximumf %7, %8 : vector<8x128xf32>
    %c0_6 = arith.constant 0 : index
    %c0_7 = arith.constant 0 : index
    %10 = vector.load %arg3[%c0_6, %c0_7] : memref<512x128xbf16, #tpu.memory_space<vmem>>, vector<128x128xbf16>
    %11 = arith.truncf %9 : vector<8x128xf32> to vector<8x128xbf16>
    %cst_8 = arith.constant dense<0.000000e+00> : vector<8x128xf32>
    %12 = tpu.matmul %11, %10, %cst_8 {dimension_numbers = #tpu.dot_dimension_numbers<[1], [0], [0], [1], [0, 0, 1, 1], [], []>} : vector<8x128xbf16>, vector<128x128xbf16>, vector<8x128xf32> -> vector<8x128xf32>
    %13 = vector.extract_strided_slice %0 {offsets = [1, 0], sizes = [1, 128], strides = [1, 1]} : vector<8x128xf32> to vector<1x128xf32>
    %14 = vector.broadcast %13 : vector<1x128xf32> to vector<8x128xf32>
    %15 = arith.addf %12, %14 : vector<8x128xf32>
    %cst_9 = arith.constant 0.000000e+00 : f32
    %16 = vector.broadcast %cst_9 : f32 to vector<8x128xf32>
    %17 = arith.maximumf %15, %16 : vector<8x128xf32>
    %c128 = arith.constant 128 : index
    %c0_10 = arith.constant 0 : index
    %18 = vector.load %arg3[%c128, %c0_10] : memref<512x128xbf16, #tpu.memory_space<vmem>>, vector<128x128xbf16>
    %19 = arith.truncf %17 : vector<8x128xf32> to vector<8x128xbf16>
    %cst_11 = arith.constant dense<0.000000e+00> : vector<8x128xf32>
    %20 = tpu.matmul %19, %18, %cst_11 {dimension_numbers = #tpu.dot_dimension_numbers<[1], [0], [0], [1], [0, 0, 1, 1], [], []>} : vector<8x128xbf16>, vector<128x128xbf16>, vector<8x128xf32> -> vector<8x128xf32>
    %21 = vector.extract_strided_slice %0 {offsets = [2, 0], sizes = [1, 128], strides = [1, 1]} : vector<8x128xf32> to vector<1x128xf32>
    %22 = vector.broadcast %21 : vector<1x128xf32> to vector<8x128xf32>
    %23 = arith.addf %20, %22 : vector<8x128xf32>
    %cst_12 = arith.constant 0.000000e+00 : f32
    %24 = vector.broadcast %cst_12 : f32 to vector<8x128xf32>
    %25 = arith.maximumf %23, %24 : vector<8x128xf32>
    %c256 = arith.constant 256 : index
    %c0_13 = arith.constant 0 : index
    %26 = vector.load %arg3[%c256, %c0_13] : memref<512x128xbf16, #tpu.memory_space<vmem>>, vector<128x128xbf16>
    %27 = arith.truncf %25 : vector<8x128xf32> to vector<8x128xbf16>
    %cst_14 = arith.constant dense<0.000000e+00> : vector<8x128xf32>
    %28 = tpu.matmul %27, %26, %cst_14 {dimension_numbers = #tpu.dot_dimension_numbers<[1], [0], [0], [1], [0, 0, 1, 1], [], []>} : vector<8x128xbf16>, vector<128x128xbf16>, vector<8x128xf32> -> vector<8x128xf32>
    %29 = vector.extract_strided_slice %0 {offsets = [3, 0], sizes = [1, 128], strides = [1, 1]} : vector<8x128xf32> to vector<1x128xf32>
    %30 = vector.broadcast %29 : vector<1x128xf32> to vector<8x128xf32>
    %31 = arith.addf %28, %30 : vector<8x128xf32>
    %cst_15 = arith.constant 0.000000e+00 : f32
    %32 = vector.broadcast %cst_15 : f32 to vector<8x128xf32>
    %33 = arith.maximumf %31, %32 : vector<8x128xf32>
    %c384 = arith.constant 384 : index
    %c0_16 = arith.constant 0 : index
    %34 = vector.load %arg3[%c384, %c0_16] : memref<512x128xbf16, #tpu.memory_space<vmem>>, vector<128x128xbf16>
    %35 = arith.truncf %33 : vector<8x128xf32> to vector<8x128xbf16>
    %cst_17 = arith.constant dense<0.000000e+00> : vector<8x128xf32>
    %36 = tpu.matmul %35, %34, %cst_17 {dimension_numbers = #tpu.dot_dimension_numbers<[1], [0], [0], [1], [0, 0, 1, 1], [], []>} : vector<8x128xbf16>, vector<128x128xbf16>, vector<8x128xf32> -> vector<8x128xf32>
    %37 = vector.extract_strided_slice %0 {offsets = [4, 0], sizes = [1, 128], strides = [1, 1]} : vector<8x128xf32> to vector<1x128xf32>
    %38 = vector.broadcast %37 : vector<1x128xf32> to vector<8x128xf32>
    %39 = arith.addf %36, %38 : vector<8x128xf32>
    %40 = tpu.iota {dimensions = array<i32: 1>} : vector<8x128xi32>
    %c0_i32 = arith.constant 0 : i32
    %41 = vector.broadcast %c0_i32 : i32 to vector<8x128xi32>
    %42 = arith.cmpi eq, %40, %41 : vector<8x128xi32>
    %c2_i32 = arith.constant 2 : i32
    %43 = vector.broadcast %c2_i32 : i32 to vector<8x128xi32>
    %44 = arith.cmpi eq, %40, %43 : vector<8x128xi32>
    %45 = arith.ori %42, %44 : vector<8x128xi1>
    %c4_i32 = arith.constant 4 : i32
    %46 = vector.broadcast %c4_i32 : i32 to vector<8x128xi32>
    %47 = arith.cmpi eq, %40, %46 : vector<8x128xi32>
    %48 = arith.ori %45, %47 : vector<8x128xi1>
    %49 = arith.negf %39 : vector<8x128xf32>
    %50 = math.exp %49 : vector<8x128xf32>
    %cst_18 = arith.constant 1.000000e+00 : f32
    %51 = vector.broadcast %cst_18 : f32 to vector<8x128xf32>
    %52 = arith.addf %51, %50 : vector<8x128xf32>
    %53 = arith.divf %51, %52 : vector<8x128xf32>
    %54 = arith.select %48, %53, %39 : vector<8x128xi1>, vector<8x128xf32>
    %55 = arith.truncf %54 : vector<8x128xf32> to vector<8x128xbf16>
    %c0_19 = arith.constant 0 : index
    %c0_20 = arith.constant 0 : index
    %56 = vector.load %arg5[%c0_19, %c0_20] : memref<8x128xbf16, #tpu.memory_space<vmem>>, vector<8x128xbf16>
    tpu.vector_store %arg5[%c0_19, %c0_20], %55 {strides = array<i32>} : memref<8x128xbf16, #tpu.memory_space<vmem>>, vector<8x128xbf16>,
    return
  }
  func.func @transform_0(%arg0: i32) -> (i32, i32) {
    %c0_i32 = arith.constant 0 : i32
    %c0_i32_0 = arith.constant 0 : i32
    return %arg0, %c0_i32 : i32, i32
  }
  func.func @transform_1(%arg0: i32) -> (i32, i32) {
    %c0_i32 = arith.constant 0 : i32
    %c0_i32_0 = arith.constant 0 : i32
    %c0_i32_1 = arith.constant 0 : i32
    return %c0_i32, %c0_i32_0 : i32, i32
  }
  func.func @transform_2(%arg0: i32) -> (i32, i32) {
    %c0_i32 = arith.constant 0 : i32
    %c0_i32_0 = arith.constant 0 : i32
    %c0_i32_1 = arith.constant 0 : i32
    return %c0_i32, %c0_i32_0 : i32, i32
  }
  func.func @transform_3(%arg0: i32) -> (i32, i32) {
    %c0_i32 = arith.constant 0 : i32
    %c0_i32_0 = arith.constant 0 : i32
    %c0_i32_1 = arith.constant 0 : i32
    return %c0_i32, %c0_i32_0 : i32, i32
  }
  func.func @transform_4(%arg0: i32) -> (i32, i32) {
    %c0_i32 = arith.constant 0 : i32
    %c0_i32_0 = arith.constant 0 : i32
    return %arg0, %c0_i32 : i32, i32
  }
}

</mosaic_0001>

<llo_original>
// kernel: _lambda_.1
$region0: #{_lambda_.1}
  #allocation0 [shape = 'u32[]', space=smem, size = 0x4, offset = 0x4, fixed_abs, tag = 'smem constant byte address 0x4 - core index']
  #allocation1 [shape = 'u32[144,128]{1,0:T(1,128)}', space=vmem, size = 0x12000, scoped, tag = 'internal scratch']
  %s0 = inlined_call_operand.hbm [shape: f32[8,10], index: 0, kind: input, shape index: {}]
  %s1 = inlined_call_operand.hbm [shape: bf16[10,128], index: 1, kind: input, shape index: {}]
  %s2 = inlined_call_operand.hbm [shape: bf16[512,128], index: 2, kind: input, shape index: {}]
  %s3 = inlined_call_operand.vmem [shape: f32[8,128], index: 3, kind: input, shape index: {}]
  %s4 = inlined_call_operand.vmem [shape: bf16[8,128], index: 4, kind: output, shape index: {}]
  %s5 = sld [smem:[#allocation0]]
  $region38: #{_lambda_.1} parent=0
    _
  %s7 = ssub.s32 1, %s5
  %s8 = scalar_select 0, %s7, %s5
  $region1: #{_lambda_.1} parent=0
    #allocation2 [shape = 'u8[4096]{0}', space=vmem, size = 0x1000, scoped, tag = 'input window, operand 0, single buffered']
    #allocation3 [shape = 's32[1]{0}', space=sflag, size = 0x4, scoped, tag = 'scoped memory for _lambda_.1']
    #allocation4 [shape = 'u8[4096]{0}', space=vmem, size = 0x1000, scoped, tag = 'input window, operand 1, single buffered']
    #allocation5 [shape = 's32[1]{0}', space=sflag, size = 0x4, scoped, tag = 'scoped memory for _lambda_.1']
    #allocation6 [shape = 'u8[131072]{0}', space=vmem, size = 0x20000, scoped, tag = 'input window, operand 2, single buffered']
    %9 = vsyncpa [#allocation3], 0
    %10 = vsyncpa [#allocation5], 0
    // Predicated region
    $region2: #{_lambda_.1} parent=1 // pred_check
      _
    $region3: #{_lambda_.1} parent=1 // pred_check_branch
      %12 = sbr.rel (0) target = $region5
    $region4: #{_lambda_.1} parent=1 // pred_region
      %s14 = ssub.s32 128, 128
      %15 = vsyncadd [#allocation3], %s14
      %s17 = sshll.u32 [#allocation2], 4
      %s18 = int_to_ptr.vmem [resolvable:$true] %s17
      %20 = dma.hbm_to_vmem [thread:$0]  %s0, 128, %s18, [#allocation3]
    $region5: #{_lambda_.1} parent=1 // pred_fallthru
      _
    // Predicated region
    $region6: #{_lambda_.1} parent=1 // pred_check
      _
    $region7: #{_lambda_.1} parent=1 // pred_check_branch
      %22 = sbr.rel (0) target = $region9
    $region8: #{_lambda_.1} parent=1 // pred_region
      %s24 = ssub.s32 128, 128
      %25 = vsyncadd [#allocation5], %s24
      %s26 = sshll.u32 [#allocation4], 4
      %s27 = int_to_ptr.vmem [resolvable:$true] %s26
      %32 = dma.hbm_to_vmem [thread:$0]  %s1, 128, %s27, [#allocation5], 64, 64, 4
    $region9: #{_lambda_.1} parent=1 // pred_fallthru
      _
    // Predicated region
    $region10: #{_lambda_.1} parent=1 // pred_check
      _
    $region11: #{_lambda_.1} parent=1 // pred_check_branch
      %34 = sbr.rel (0) target = $region13
    $region12: #{_lambda_.1} parent=1 // pred_region
      %s36 = ssub.s32 4096, 4096
      %37 = vsyncadd [#allocation5], %s36
      %s38 = sshll.u32 [#allocation6], 4
      %s39 = int_to_ptr.vmem [resolvable:$true] %s38
      %44 = dma.hbm_to_vmem [thread:$0]  %s2, 4096, %s39, [#allocation5], 64, 64, 4
    $region13: #{_lambda_.1} parent=1 // pred_fallthru
      _
    // Predicated region
    $region14: #{_lambda_.1} parent=1 // pred_check
      _
    $region15: #{_lambda_.1} parent=1 // pred_check_branch
      %46 = sbr.rel (0) target = $region17
    $region16: #{_lambda_.1} parent=1 // pred_region
      _
    $region17: #{_lambda_.1} parent=1 // pred_fallthru
      _
    // Predicated region
    $region18: #{_lambda_.1} parent=1 // pred_check
      _
    $region19: #{_lambda_.1} parent=1 // pred_check_branch
      %48 = sbr.rel (0) target = $region21
    $region20: #{_lambda_.1} parent=1 // pred_region
      %49 = dma.done [#allocation3], 128
    $region21: #{_lambda_.1} parent=1 // pred_fallthru
      _
    // Predicated region
    $region22: #{_lambda_.1} parent=1 // pred_check
      _
    $region23: #{_lambda_.1} parent=1 // pred_check_branch
      %51 = sbr.rel (0) target = $region25
    $region24: #{_lambda_.1} parent=1 // pred_region
      %52 = dma.done [#allocation5], 128
    $region25: #{_lambda_.1} parent=1 // pred_fallthru
      _
    // Predicated region
    $region26: #{_lambda_.1} parent=1 // pred_check
      _
    $region27: #{_lambda_.1} parent=1 // pred_check_branch
      %54 = sbr.rel (0) target = $region29
    $region28: #{_lambda_.1} parent=1 // pred_region
      %55 = dma.done [#allocation5], 4096
    $region29: #{_lambda_.1} parent=1 // pred_fallthru
      _
    %v57 = vld [vmem:[%s3] sm:$0xff]
    %v58 = vld [vmem:[#allocation2] sm:$0xff]
    %v59 = vld [vmem:[#allocation4] sm:$0xf]
    %v60 = vld [vmem:[#allocation4 + $0x4] sm:$0x1]
    %v61 = vpack.c.bf16 %v58, %v58
    %v62 = vlaneseq
    %v63 = vshrl.u32 %v62, 7
    %v64 = vsub.s32 0, %v63
    %v65 = vrot.slane %v57, %v64
    %v68 = vunpack.c.l.b16 %v59
    %v69 = vunpack.c.l.b16 %v60
    %v70 = vpack.c.b16 %v69, %v68
    %vm71 = vcmask 80896
    %v73 = vsel %vm71, %v61, 0
    %vm75 = vcmask 1044480
    %v77 = vsel %vm75, %v70, 0
    %79 = vmatprep.subr.bf16.mxu0 0
    %80 = vmatpush1.bf16.msra.mxu0 %v77
    %81 = vmatprep.subr.bf16.mxu0 0
    %82 = vmatpush1.bf16.msra.mxu0 0
    %83 = vmatprep.subr.bf16.mxu0 0
    %84 = vmatpush1.bf16.msra.mxu0 0
    %85 = vmatprep.subr.bf16.mxu0 0
    %86 = vmatpush1.bf16.msra.mxu0 0
    %87 = vmatprep.subr.bf16.mxu0 0
    %88 = vmatpush1.bf16.msra.mxu0 0
    %89 = vmatprep.subr.bf16.mxu0 0
    %90 = vmatpush1.bf16.msra.mxu0 0
    %91 = vmatprep.subr.bf16.mxu0 0
    %92 = vmatpush1.bf16.msra.mxu0 0
    %93 = vmatprep.subr.bf16.mxu0 0
    %94 = vmatpush1.bf16.msra.mxu0 0
    %95 = vmatprep.subr.bf16.mxu0 0
    %96 = vmatpush1.bf16.msra.mxu0 0
    %97 = vmatprep.subr.bf16.mxu0 0
    %98 = vmatpush1.bf16.msra.mxu0 0
    %99 = vmatprep.subr.bf16.mxu0 0
    %100 = vmatpush1.bf16.msra.mxu0 0
    %101 = vmatprep.subr.bf16.mxu0 0
    %102 = vmatpush1.bf16.msra.mxu0 0
    %103 = vmatprep.subr.bf16.mxu0 0
    %104 = vmatpush1.bf16.msra.mxu0 0
    %105 = vmatprep.subr.bf16.mxu0 0
    %106 = vmatpush1.bf16.msra.mxu0 0
    %107 = vmatprep.subr.bf16.mxu0 0
    %108 = vmatpush1.bf16.msra.mxu0 0
    %109 = vmatprep.subr.bf16.mxu0 0
    %110 = vmatpush1.bf16.msra.mxu0 0
    %111 = vmatprep.mubr.bf16.mxu0 0
    %112 = vmatmul.mubr.bf16.gmra.mrb[0].mxu0 %v73
    %v113 = vpop.f32.mrb[0].mxu0
    %v114 = vadd.f32 %v65, %v113
    %v115 = vpop.f32.mrb[0].mxu0
    %v116 = vpop.f32.mrb[0].mxu0
    %v117 = vpop.f32.mrb[0].mxu0
    %118 = vdwg.mxu0
    %v119 = vmax.f32 %v114, 0.0
    %v120 = vld [vmem:[#allocation6] sm:$0xf]
    %v121 = vld [vmem:[#allocation6 + $0x4] sm:$0xf]
    %v122 = vld [vmem:[#allocation6 + $0x8] sm:$0xf]
    %v123 = vld [vmem:[#allocation6 + $0xc] sm:$0xf]
    %v124 = vld [vmem:[#allocation6 + $0x10] sm:$0xf]
    %v125 = vld [vmem:[#allocation6 + $0x14] sm:$0xf]
    %v126 = vld [vmem:[#allocation6 + $0x18] sm:$0xf]
    %v127 = vld [vmem:[#allocation6 + $0x1c] sm:$0xf]
    %v128 = vld [vmem:[#allocation6 + $0x20] sm:$0xf]
    %v129 = vld [vmem:[#allocation6 + $0x24] sm:$0xf]
    %v130 = vld [vmem:[#allocation6 + $0x28] sm:$0xf]
    %v131 = vld [vmem:[#allocation6 + $0x2c] sm:$0xf]
    %v132 = vld [vmem:[#allocation6 + $0x30] sm:$0xf]
    %v133 = vld [vmem:[#allocation6 + $0x34] sm:$0xf]
    %v134 = vld [vmem:[#allocation6 + $0x38] sm:$0xf]
    %v135 = vld [vmem:[#allocation6 + $0x3c] sm:$0xf]
    %v136 = vpack.c.bf16 %v119, %v119
    %v137 = vlaneseq
    %v138 = vshrl.u32 %v137, 7
    %v139 = vsub.s32 1, %v138
    %v140 = vrot.slane %v57, %v139
    %v157 = vunpack.c.l.b16 %v120
    %v158 = vunpack.c.l.b16 %v121
    %v159 = vunpack.c.l.b16 %v122
    %v160 = vunpack.c.l.b16 %v123
    %v161 = vunpack.c.l.b16 %v124
    %v162 = vunpack.c.l.b16 %v125
    %v163 = vunpack.c.l.b16 %v126
    %v164 = vunpack.c.l.b16 %v127
    %v165 = vunpack.c.l.b16 %v128
    %v166 = vunpack.c.l.b16 %v129
    %v167 = vunpack.c.l.b16 %v130
    %v168 = vunpack.c.l.b16 %v131
    %v169 = vunpack.c.l.b16 %v132
    %v170 = vunpack.c.l.b16 %v133
    %v171 = vunpack.c.l.b16 %v134
    %v172 = vunpack.c.l.b16 %v135
    %v173 = vpack.c.b16 %v158, %v157
    %v174 = vpack.c.b16 %v160, %v159
    %v175 = vpack.c.b16 %v162, %v161
    %v176 = vpack.c.b16 %v164, %v163
    %v177 = vpack.c.b16 %v166, %v165
    %v178 = vpack.c.b16 %v168, %v167
    %v179 = vpack.c.b16 %v170, %v169
    %v180 = vpack.c.b16 %v172, %v171
    %189 = vmatprep.subr.bf16.mxu0 0
    %190 = vmatpush1.bf16.msra.mxu0 %v173
    %191 = vmatprep.subr.bf16.mxu0 0
    %192 = vmatpush1.bf16.msra.mxu0 %v174
    %193 = vmatprep.subr.bf16.mxu0 0
    %194 = vmatpush1.bf16.msra.mxu0 %v175
    %195 = vmatprep.subr.bf16.mxu0 0
    %196 = vmatpush1.bf16.msra.mxu0 %v176
    %197 = vmatprep.subr.bf16.mxu0 0
    %198 = vmatpush1.bf16.msra.mxu0 %v177
    %199 = vmatprep.subr.bf16.mxu0 0
    %200 = vmatpush1.bf16.msra.mxu0 %v178
    %201 = vmatprep.subr.bf16.mxu0 0
    %202 = vmatpush1.bf16.msra.mxu0 %v179
    %203 = vmatprep.subr.bf16.mxu0 0
    %204 = vmatpush1.bf16.msra.mxu0 %v180
    %205 = vmatprep.subr.bf16.mxu0 0
    %206 = vmatpush1.bf16.msra.mxu0 0
    %207 = vmatprep.subr.bf16.mxu0 0
    %208 = vmatpush1.bf16.msra.mxu0 0
    %209 = vmatprep.subr.bf16.mxu0 0
    %210 = vmatpush1.bf16.msra.mxu0 0
    %211 = vmatprep.subr.bf16.mxu0 0
    %212 = vmatpush1.bf16.msra.mxu0 0
    %213 = vmatprep.subr.bf16.mxu0 0
    %214 = vmatpush1.bf16.msra.mxu0 0
    %215 = vmatprep.subr.bf16.mxu0 0
    %216 = vmatpush1.bf16.msra.mxu0 0
    %217 = vmatprep.subr.bf16.mxu0 0
    %218 = vmatpush1.bf16.msra.mxu0 0
    %219 = vmatprep.subr.bf16.mxu0 0
    %220 = vmatpush1.bf16.msra.mxu0 0
    %221 = vmatprep.mubr.bf16.mxu0 0
    %222 = vmatmul.mubr.bf16.gmra.mrb[0].mxu0 %v136
    %v223 = vpop.f32.mrb[0].mxu0
    %v224 = vadd.f32 %v140, %v223
    %v225 = vpop.f32.mrb[0].mxu0
    %v226 = vpop.f32.mrb[0].mxu0
    %v227 = vpop.f32.mrb[0].mxu0
    %228 = vdwg.mxu0
    %v229 = vmax.f32 %v224, 0.0
    %v230 = vld [vmem:[#allocation6 + $0x40] sm:$0xf]
    %v231 = vld [vmem:[#allocation6 + $0x44] sm:$0xf]
    %v232 = vld [vmem:[#allocation6 + $0x48] sm:$0xf]
    %v233 = vld [vmem:[#allocation6 + $0x4c] sm:$0xf]
    %v234 = vld [vmem:[#allocation6 + $0x50] sm:$0xf]
    %v235 = vld [vmem:[#allocation6 + $0x54] sm:$0xf]
    %v236 = vld [vmem:[#allocation6 + $0x58] sm:$0xf]
    %v237 = vld [vmem:[#allocation6 + $0x5c] sm:$0xf]
    %v238 = vld [vmem:[#allocation6 + $0x60] sm:$0xf]
    %v239 = vld [vmem:[#allocation6 + $0x64] sm:$0xf]
    %v240 = vld [vmem:[#allocation6 + $0x68] sm:$0xf]
    %v241 = vld [vmem:[#allocation6 + $0x6c] sm:$0xf]
    %v242 = vld [vmem:[#allocation6 + $0x70] sm:$0xf]
    %v243 = vld [vmem:[#allocation6 + $0x74] sm:$0xf]
    %v244 = vld [vmem:[#allocation6 + $0x78] sm:$0xf]
    %v245 = vld [vmem:[#allocation6 + $0x7c] sm:$0xf]
    %v246 = vpack.c.bf16 %v229, %v229
    %v247 = vlaneseq
    %v248 = vshrl.u32 %v247, 7
    %v249 = vsub.s32 2, %v248
    %v250 = vrot.slane %v57, %v249
    %v267 = vunpack.c.l.b16 %v230
    %v268 = vunpack.c.l.b16 %v231
    %v269 = vunpack.c.l.b16 %v232
    %v270 = vunpack.c.l.b16 %v233
    %v271 = vunpack.c.l.b16 %v234
    %v272 = vunpack.c.l.b16 %v235
    %v273 = vunpack.c.l.b16 %v236
    %v274 = vunpack.c.l.b16 %v237
    %v275 = vunpack.c.l.b16 %v238
    %v276 = vunpack.c.l.b16 %v239
    %v277 = vunpack.c.l.b16 %v240
    %v278 = vunpack.c.l.b16 %v241
    %v279 = vunpack.c.l.b16 %v242
    %v280 = vunpack.c.l.b16 %v243
    %v281 = vunpack.c.l.b16 %v244
    %v282 = vunpack.c.l.b16 %v245
    %v283 = vpack.c.b16 %v268, %v267
    %v284 = vpack.c.b16 %v270, %v269
    %v285 = vpack.c.b16 %v272, %v271
    %v286 = vpack.c.b16 %v274, %v273
    %v287 = vpack.c.b16 %v276, %v275
    %v288 = vpack.c.b16 %v278, %v277
    %v289 = vpack.c.b16 %v280, %v279
    %v290 = vpack.c.b16 %v282, %v281
    %299 = vmatprep.subr.bf16.mxu0 0
    %300 = vmatpush1.bf16.msra.mxu0 %v283
    %301 = vmatprep.subr.bf16.mxu0 0
    %302 = vmatpush1.bf16.msra.mxu0 %v284
    %303 = vmatprep.subr.bf16.mxu0 0
    %304 = vmatpush1.bf16.msra.mxu0 %v285
    %305 = vmatprep.subr.bf16.mxu0 0
    %306 = vmatpush1.bf16.msra.mxu0 %v286
    %307 = vmatprep.subr.bf16.mxu0 0
    %308 = vmatpush1.bf16.msra.mxu0 %v287
    %309 = vmatprep.subr.bf16.mxu0 0
    %310 = vmatpush1.bf16.msra.mxu0 %v288
    %311 = vmatprep.subr.bf16.mxu0 0
    %312 = vmatpush1.bf16.msra.mxu0 %v289
    %313 = vmatprep.subr.bf16.mxu0 0
    %314 = vmatpush1.bf16.msra.mxu0 %v290
    %315 = vmatprep.subr.bf16.mxu0 0
    %316 = vmatpush1.bf16.msra.mxu0 0
    %317 = vmatprep.subr.bf16.mxu0 0
    %318 = vmatpush1.bf16.msra.mxu0 0
    %319 = vmatprep.subr.bf16.mxu0 0
    %320 = vmatpush1.bf16.msra.mxu0 0
    %321 = vmatprep.subr.bf16.mxu0 0
    %322 = vmatpush1.bf16.msra.mxu0 0
    %323 = vmatprep.subr.bf16.mxu0 0
    %324 = vmatpush1.bf16.msra.mxu0 0
    %325 = vmatprep.subr.bf16.mxu0 0
    %326 = vmatpush1.bf16.msra.mxu0 0
    %327 = vmatprep.subr.bf16.mxu0 0
    %328 = vmatpush1.bf16.msra.mxu0 0
    %329 = vmatprep.subr.bf16.mxu0 0
    %330 = vmatpush1.bf16.msra.mxu0 0
    %331 = vmatprep.mubr.bf16.mxu0 0
    %332 = vmatmul.mubr.bf16.gmra.mrb[0].mxu0 %v246
    %v333 = vpop.f32.mrb[0].mxu0
    %v334 = vadd.f32 %v250, %v333
    %v335 = vpop.f32.mrb[0].mxu0
    %v336 = vpop.f32.mrb[0].mxu0
    %v337 = vpop.f32.mrb[0].mxu0
    %338 = vdwg.mxu0
    %v339 = vmax.f32 %v334, 0.0
    %v340 = vld [vmem:[#allocation6 + $0x80] sm:$0xf]
    %v341 = vld [vmem:[#allocation6 + $0x84] sm:$0xf]
    %v342 = vld [vmem:[#allocation6 + $0x88] sm:$0xf]
    %v343 = vld [vmem:[#allocation6 + $0x8c] sm:$0xf]
    %v344 = vld [vmem:[#allocation6 + $0x90] sm:$0xf]
    %v345 = vld [vmem:[#allocation6 + $0x94] sm:$0xf]
    %v346 = vld [vmem:[#allocation6 + $0x98] sm:$0xf]
    %v347 = vld [vmem:[#allocation6 + $0x9c] sm:$0xf]
    %v348 = vld [vmem:[#allocation6 + $0xa0] sm:$0xf]
    %v349 = vld [vmem:[#allocation6 + $0xa4] sm:$0xf]
    %v350 = vld [vmem:[#allocation6 + $0xa8] sm:$0xf]
    %v351 = vld [vmem:[#allocation6 + $0xac] sm:$0xf]
    %v352 = vld [vmem:[#allocation6 + $0xb0] sm:$0xf]
    %v353 = vld [vmem:[#allocation6 + $0xb4] sm:$0xf]
    %v354 = vld [vmem:[#allocation6 + $0xb8] sm:$0xf]
    %v355 = vld [vmem:[#allocation6 + $0xbc] sm:$0xf]
    %v356 = vpack.c.bf16 %v339, %v339
    %v357 = vlaneseq
    %v358 = vshrl.u32 %v357, 7
    %v359 = vsub.s32 3, %v358
    %v360 = vrot.slane %v57, %v359
    %v377 = vunpack.c.l.b16 %v340
    %v378 = vunpack.c.l.b16 %v341
    %v379 = vunpack.c.l.b16 %v342
    %v380 = vunpack.c.l.b16 %v343
    %v381 = vunpack.c.l.b16 %v344
    %v382 = vunpack.c.l.b16 %v345
    %v383 = vunpack.c.l.b16 %v346
    %v384 = vunpack.c.l.b16 %v347
    %v385 = vunpack.c.l.b16 %v348
    %v386 = vunpack.c.l.b16 %v349
    %v387 = vunpack.c.l.b16 %v350
    %v388 = vunpack.c.l.b16 %v351
    %v389 = vunpack.c.l.b16 %v352
    %v390 = vunpack.c.l.b16 %v353
    %v391 = vunpack.c.l.b16 %v354
    %v392 = vunpack.c.l.b16 %v355
    %v393 = vpack.c.b16 %v378, %v377
    %v394 = vpack.c.b16 %v380, %v379
    %v395 = vpack.c.b16 %v382, %v381
    %v396 = vpack.c.b16 %v384, %v383
    %v397 = vpack.c.b16 %v386, %v385
    %v398 = vpack.c.b16 %v388, %v387
    %v399 = vpack.c.b16 %v390, %v389
    %v400 = vpack.c.b16 %v392, %v391
    %409 = vmatprep.subr.bf16.mxu0 0
    %410 = vmatpush1.bf16.msra.mxu0 %v393
    %411 = vmatprep.subr.bf16.mxu0 0
    %412 = vmatpush1.bf16.msra.mxu0 %v394
    %413 = vmatprep.subr.bf16.mxu0 0
    %414 = vmatpush1.bf16.msra.mxu0 %v395
    %415 = vmatprep.subr.bf16.mxu0 0
    %416 = vmatpush1.bf16.msra.mxu0 %v396
    %417 = vmatprep.subr.bf16.mxu0 0
    %418 = vmatpush1.bf16.msra.mxu0 %v397
    %419 = vmatprep.subr.bf16.mxu0 0
    %420 = vmatpush1.bf16.msra.mxu0 %v398
    %421 = vmatprep.subr.bf16.mxu0 0
    %422 = vmatpush1.bf16.msra.mxu0 %v399
    %423 = vmatprep.subr.bf16.mxu0 0
    %424 = vmatpush1.bf16.msra.mxu0 %v400
    %425 = vmatprep.subr.bf16.mxu0 0
    %426 = vmatpush1.bf16.msra.mxu0 0
    %427 = vmatprep.subr.bf16.mxu0 0
    %428 = vmatpush1.bf16.msra.mxu0 0
    %429 = vmatprep.subr.bf16.mxu0 0
    %430 = vmatpush1.bf16.msra.mxu0 0
    %431 = vmatprep.subr.bf16.mxu0 0
    %432 = vmatpush1.bf16.msra.mxu0 0
    %433 = vmatprep.subr.bf16.mxu0 0
    %434 = vmatpush1.bf16.msra.mxu0 0
    %435 = vmatprep.subr.bf16.mxu0 0
    %436 = vmatpush1.bf16.msra.mxu0 0
    %437 = vmatprep.subr.bf16.mxu0 0
    %438 = vmatpush1.bf16.msra.mxu0 0
    %439 = vmatprep.subr.bf16.mxu0 0
    %440 = vmatpush1.bf16.msra.mxu0 0
    %441 = vmatprep.mubr.bf16.mxu0 0
    %442 = vmatmul.mubr.bf16.gmra.mrb[0].mxu0 %v356
    %v443 = vpop.f32.mrb[0].mxu0
    %v444 = vadd.f32 %v360, %v443
    %v445 = vpop.f32.mrb[0].mxu0
    %v446 = vpop.f32.mrb[0].mxu0
    %v447 = vpop.f32.mrb[0].mxu0
    %448 = vdwg.mxu0
    %v449 = vmax.f32 %v444, 0.0
    %v450 = vld [vmem:[#allocation6 + $0xc0] sm:$0xf]
    %v451 = vld [vmem:[#allocation6 + $0xc4] sm:$0xf]
    %v452 = vld [vmem:[#allocation6 + $0xc8] sm:$0xf]
    %v453 = vld [vmem:[#allocation6 + $0xcc] sm:$0xf]
    %v454 = vld [vmem:[#allocation6 + $0xd0] sm:$0xf]
    %v455 = vld [vmem:[#allocation6 + $0xd4] sm:$0xf]
    %v456 = vld [vmem:[#allocation6 + $0xd8] sm:$0xf]
    %v457 = vld [vmem:[#allocation6 + $0xdc] sm:$0xf]
    %v458 = vld [vmem:[#allocation6 + $0xe0] sm:$0xf]
    %v459 = vld [vmem:[#allocation6 + $0xe4] sm:$0xf]
    %v460 = vld [vmem:[#allocation6 + $0xe8] sm:$0xf]
    %v461 = vld [vmem:[#allocation6 + $0xec] sm:$0xf]
    %v462 = vld [vmem:[#allocation6 + $0xf0] sm:$0xf]
    %v463 = vld [vmem:[#allocation6 + $0xf4] sm:$0xf]
    %v464 = vld [vmem:[#allocation6 + $0xf8] sm:$0xf]
    %v465 = vld [vmem:[#allocation6 + $0xfc] sm:$0xf]
    %v466 = vpack.c.bf16 %v449, %v449
    %v467 = vlaneseq
    %v468 = vshrl.u32 %v467, 7
    %v469 = vsub.s32 4, %v468
    %v470 = vrot.slane %v57, %v469
    %v487 = vunpack.c.l.b16 %v450
    %v488 = vunpack.c.l.b16 %v451
    %v489 = vunpack.c.l.b16 %v452
    %v490 = vunpack.c.l.b16 %v453
    %v491 = vunpack.c.l.b16 %v454
    %v492 = vunpack.c.l.b16 %v455
    %v493 = vunpack.c.l.b16 %v456
    %v494 = vunpack.c.l.b16 %v457
    %v495 = vunpack.c.l.b16 %v458
    %v496 = vunpack.c.l.b16 %v459
    %v497 = vunpack.c.l.b16 %v460
    %v498 = vunpack.c.l.b16 %v461
    %v499 = vunpack.c.l.b16 %v462
    %v500 = vunpack.c.l.b16 %v463
    %v501 = vunpack.c.l.b16 %v464
    %v502 = vunpack.c.l.b16 %v465
    %v503 = vpack.c.b16 %v488, %v487
    %v504 = vpack.c.b16 %v490, %v489
    %v505 = vpack.c.b16 %v492, %v491
    %v506 = vpack.c.b16 %v494, %v493
    %v507 = vpack.c.b16 %v496, %v495
    %v508 = vpack.c.b16 %v498, %v497
    %v509 = vpack.c.b16 %v500, %v499
    %v510 = vpack.c.b16 %v502, %v501
    %519 = vmatprep.subr.bf16.mxu0 0
    %520 = vmatpush1.bf16.msra.mxu0 %v503
    %521 = vmatprep.subr.bf16.mxu0 0
    %522 = vmatpush1.bf16.msra.mxu0 %v504
    %523 = vmatprep.subr.bf16.mxu0 0
    %524 = vmatpush1.bf16.msra.mxu0 %v505
    %525 = vmatprep.subr.bf16.mxu0 0
    %526 = vmatpush1.bf16.msra.mxu0 %v506
    %527 = vmatprep.subr.bf16.mxu0 0
    %528 = vmatpush1.bf16.msra.mxu0 %v507
    %529 = vmatprep.subr.bf16.mxu0 0
    %530 = vmatpush1.bf16.msra.mxu0 %v508
    %531 = vmatprep.subr.bf16.mxu0 0
    %532 = vmatpush1.bf16.msra.mxu0 %v509
    %533 = vmatprep.subr.bf16.mxu0 0
    %534 = vmatpush1.bf16.msra.mxu0 %v510
    %535 = vmatprep.subr.bf16.mxu0 0
    %536 = vmatpush1.bf16.msra.mxu0 0
    %537 = vmatprep.subr.bf16.mxu0 0
    %538 = vmatpush1.bf16.msra.mxu0 0
    %539 = vmatprep.subr.bf16.mxu0 0
    %540 = vmatpush1.bf16.msra.mxu0 0
    %541 = vmatprep.subr.bf16.mxu0 0
    %542 = vmatpush1.bf16.msra.mxu0 0
    %543 = vmatprep.subr.bf16.mxu0 0
    %544 = vmatpush1.bf16.msra.mxu0 0
    %545 = vmatprep.subr.bf16.mxu0 0
    %546 = vmatpush1.bf16.msra.mxu0 0
    %547 = vmatprep.subr.bf16.mxu0 0
    %548 = vmatpush1.bf16.msra.mxu0 0
    %549 = vmatprep.subr.bf16.mxu0 0
    %550 = vmatpush1.bf16.msra.mxu0 0
    %551 = vmatprep.mubr.bf16.mxu0 0
    %552 = vmatmul.mubr.bf16.gmra.mrb[0].mxu0 %v466
    %v553 = vpop.f32.mrb[0].mxu0
    %v554 = vadd.f32 %v470, %v553
    %v555 = vpop.f32.mrb[0].mxu0
    %v556 = vpop.f32.mrb[0].mxu0
    %v557 = vpop.f32.mrb[0].mxu0
    %558 = vdwg.mxu0
    %v559 = vlaneseq
    %v560 = vand.u32 %v559, 127
    %vm561 = vcmp.eq.s32.totalorder %v560, 0
    %vm562 = vcmp.eq.s32.totalorder %v560, 2
    %vm563 = vmor %vm561, %vm562
    %vm564 = vcmp.eq.s32.totalorder %v560, 4
    %vm565 = vmor %vm563, %vm564
    %v566 = vxor.u32 %v554, 2147483648
    %v567 = vmul.f32 %v566, 1.442695
    %v568 = vpow.pop %v567
    %v569 = vadd.f32 %v568, 1.0
    %v570 = vrcp.pop %v569
    %v571 = vmul.f32 1.0, %v570
    %v572 = vsel %vm565, %v571, %v554
    %v573 = vpack.c.bf16 %v572, %v572
    %574 = vst [vmem:[%s4] sm:$0xf] %v573
    // Predicated region
    $region30: #{_lambda_.1} parent=1 // pred_check
      _
    $region31: #{_lambda_.1} parent=1 // pred_check_branch
      %576 = sbr.rel (0) target = $region33
    $region32: #{_lambda_.1} parent=1 // pred_region
      _
    $region33: #{_lambda_.1} parent=1 // pred_fallthru
      _
    // Predicated region
    $region34: #{_lambda_.1} parent=1 // pred_check
      _
    $region35: #{_lambda_.1} parent=1 // pred_check_branch
      %578 = sbr.rel (0) target = $region37
    $region36: #{_lambda_.1} parent=1 // pred_region
      _
    $region37: #{_lambda_.1} parent=1 // pred_fallthru
      _
    %579 = vsyncpa [#allocation3], 1
    %580 = vsyncpa [#allocation5], 1

</llo_original>
